<compile_context>
chip_gen: v6e
topology: v6e:2x2x1
jax: 0.10.0
libtpu: 0.0.40
codegen_flags: <defaults>
</compile_context>

<pallas_src>
import functools

import jax
import jax.numpy as jnp
from jax.experimental import pallas as pl
from jax.experimental.pallas import tpu as pltpu


def _round_up(v, m):
    return (v + m - 1) // m * m


def _pick_tiles(np_):
    """Pick (tm, tk) dividing the padded node dim np_ (np_ is a multiple of 128)."""
    # Contraction tile: as big as possible (mem-bound; larger tiles amortize the
    # ~0.35us per-step overhead and get closer to HBM roofline).
    tk = 128
    for cand in (512, 256, 128):
        if np_ % cand == 0:
            tk = cand
            break
    # Row tile: keep >= 2 row tiles when possible so the "parallel" axis can shard
    # across v7x's 2 TensorCores (costless on v5e/v6e: epilogue is per-row-tile only).
    tm = np_
    for cand in (512, 256, 128):
        if np_ % cand == 0 and np_ // cand >= 2:
            tm = cand
            break
    return tm, tk


# --------------------------------------------------------------------------- #
# Kernel A:  hw2 = relu((adj @ x) @ W1 + b1) @ W2     (gc1 + eval-dropout + gc2's h1@W2)
#   grid = (row tiles i, adj contraction tiles k); k is the reduction axis (last).
#   adj streams as bf16 (tm, tk) tiles; x is a VMEM-resident full block (bf16).
# --------------------------------------------------------------------------- #
def _gc1_kernel(adj_ref, x_ref, w1_ref, b1_ref, w2_ref, hw2_ref, acc_ref, *, tk):
    k = pl.program_id(1)

    @pl.when(k == 0)
    def _():
        acc_ref[...] = jnp.zeros_like(acc_ref)

    ks = pl.multiple_of(k * tk, tk)
    # (adj @ x) accumulation: bf16 MXU inputs, f32 accumulation.
    acc_ref[...] += jnp.dot(
        adj_ref[...],                       # bf16
        x_ref[pl.ds(ks, tk), :],            # bf16, slice of the resident full block
        preferred_element_type=jnp.float32,
    )

    @pl.when(k == pl.num_programs(1) - 1)
    def _():
        h1 = jnp.dot(
            acc_ref[...].astype(jnp.bfloat16),
            w1_ref[...],                    # bf16
            preferred_element_type=jnp.float32,
        ) + b1_ref[...]
        h1 = jnp.maximum(h1, 0.0)
        # dropout: eval-mode identity.
        # TODO(synk): training-mode dropout would mask h1 via pltpu.prng_seed/prng_random_bits.
        hw2_ref[...] = jnp.dot(
            h1.astype(jnp.bfloat16),
            w2_ref[...],                    # bf16
            preferred_element_type=jnp.float32,
        ).astype(hw2_ref.dtype)


# --------------------------------------------------------------------------- #
# Kernel B:  h2 = relu(adj @ hw2 + b2);  out = h2 @ W3 + b3  (stored transposed, (1, N))
#   adj streams as bf16 (tm, tk) tiles; hw2 is a VMEM-resident full block (bf16).
# --------------------------------------------------------------------------- #
def _gc2_fc3_kernel(adj_ref, hw2_ref, b2_ref, w3t_ref, b3_ref, out_ref, acc_ref, *, tk):
    k = pl.program_id(1)

    @pl.when(k == 0)
    def _():
        acc_ref[...] = jnp.zeros_like(acc_ref)

    ks = pl.multiple_of(k * tk, tk)
    acc_ref[...] += jnp.dot(
        adj_ref[...],                       # bf16
        hw2_ref[pl.ds(ks, tk), :],          # bf16, slice of the resident full block
        preferred_element_type=jnp.float32,
    )

    @pl.when(k == pl.num_programs(1) - 1)
    def _():
        h2 = jnp.maximum(acc_ref[...] + b2_ref[...], 0.0)        # (tm, nhid) f32
        # fc3 computed transposed: contract the last dims (q @ k^T pattern) so the
        # result is a lane-dense (1, tm) row -> unmasked stores.
        row = jnp.einsum(
            "oh,mh->om",
            w3t_ref[...],                   # bf16 (1, nhid)
            h2.astype(jnp.bfloat16),
            preferred_element_type=jnp.float32,
        )
        out_ref[...] = row + b3_ref[0]


# --------------------------------------------------------------------------- #
# Wrapper
# --------------------------------------------------------------------------- #
def gpn_valuator_forward(x, adj, w1, b1, w2, b2, w3, b3, *, tm=None, tk=None):
    """x:[N,nfeat]  adj:[N,N]  w1:[nfeat,2h] b1:[2h]  w2:[2h,h] b2:[h]  w3:[h,1] b3:[1]."""
    n, nfeat = x.shape
    h1dim = w1.shape[1]            # 2*nhid
    h2dim = w2.shape[1]            # nhid

    np_ = _round_up(n, 128)        # pad node dim (zero rows/cols: no contribution)
    auto_tm, auto_tk = _pick_tiles(np_)
    tm = auto_tm if tm is None else tm
    tk = auto_tk if tk is None else tk
    assert np_ % tm == 0 and np_ % tk == 0
    gi, gk = np_ // tm, np_ // tk

    # Cast fused into the pad producer; adj / x / weights go to HBM as bf16.
    # TODO(synk): callers doing many forwards on the same graph should pre-pad and
    # cache adj_p outside this function to avoid re-padding per call.
    adj_p = jnp.pad(adj.astype(jnp.bfloat16), ((0, np_ - n), (0, np_ - n)))
    x_p = jnp.pad(x.astype(jnp.bfloat16), ((0, np_ - n), (0, 0)))
    w1_b = w1.astype(jnp.bfloat16)
    w2_b = w2.astype(jnp.bfloat16)
    w3_t = w3.reshape(1, h2dim).astype(jnp.bfloat16)
    b1_2 = b1.reshape(1, h1dim).astype(jnp.float32)
    b2_2 = b2.reshape(1, h2dim).astype(jnp.float32)
    b3_1 = b3.reshape(1).astype(jnp.float32)

    cparams = pltpu.CompilerParams(
        dimension_semantics=("parallel", "arbitrary"),
        vmem_limit_bytes=32 * 1024 * 1024,
    )

    # ---- Kernel A: hw2 = relu((adj @ x) @ W1 + b1) @ W2 ---------------------
    hw2 = pl.pallas_call(
        functools.partial(_gc1_kernel, tk=tk),
        out_shape=jax.ShapeDtypeStruct((np_, h2dim), jnp.bfloat16),
        grid=(gi, gk),
        in_specs=[
            pl.BlockSpec((tm, tk), lambda i, k: (i, k)),           # adj (bf16 stream)
            pl.BlockSpec((np_, nfeat), lambda i, k: (0, 0)),       # x   (bf16 resident)
            pl.BlockSpec((nfeat, h1dim), lambda i, k: (0, 0)),     # W1  (bf16)
            pl.BlockSpec((1, h1dim), lambda i, k: (0, 0)),         # b1  (f32)
            pl.BlockSpec((h1dim, h2dim), lambda i, k: (0, 0)),     # W2  (bf16)
        ],
        out_specs=pl.BlockSpec((tm, h2dim), lambda i, k: (i, 0)),
        scratch_shapes=[pltpu.VMEM((tm, nfeat), jnp.float32)],
        compiler_params=cparams,
        cost_estimate=pl.CostEstimate(
            flops=2 * (np_ * np_ * nfeat + np_ * nfeat * h1dim + np_ * h1dim * h2dim),
            transcendentals=0,
            bytes_accessed=2 * np_ * np_ + 2 * np_ * nfeat + 2 * np_ * h2dim
            + 2 * (nfeat * h1dim + h1dim * h2dim) + 4 * h1dim,
        ),
    )(adj_p, x_p, w1_b, b1_2, w2_b)

    # ---- Kernel B: out^T = (relu(adj @ hw2 + b2)) @ W3 + b3  ----------------
    out_t = pl.pallas_call(
        functools.partial(_gc2_fc3_kernel, tk=tk),
        out_shape=jax.ShapeDtypeStruct((1, np_), jnp.float32),
        grid=(gi, gk),
        in_specs=[
            pl.BlockSpec((tm, tk), lambda i, k: (i, k)),           # adj (bf16 stream)
            pl.BlockSpec((np_, h2dim), lambda i, k: (0, 0)),       # hw2 (bf16 resident)
            pl.BlockSpec((1, h2dim), lambda i, k: (0, 0)),         # b2  (f32)
            pl.BlockSpec((1, h2dim), lambda i, k: (0, 0)),         # w3^T (bf16)
            pl.BlockSpec(memory_space=pltpu.MemorySpace.SMEM),     # b3 scalar
        ],
        out_specs=pl.BlockSpec((1, tm), lambda i, k: (0, i)),
        scratch_shapes=[pltpu.VMEM((tm, h2dim), jnp.float32)],
        compiler_params=cparams,
        cost_estimate=pl.CostEstimate(
            flops=2 * (np_ * np_ * h2dim + np_ * h2dim),
            transcendentals=0,
            bytes_accessed=2 * np_ * np_ + 2 * np_ * h2dim + 4 * np_
            + 4 * h2dim + 2 * h2dim + 4,
        ),
    )(adj_p, hw2, b2_2, w3_t, b3_1)

    return out_t[0, :n].reshape(n, 1)


# --------------------------------------------------------------------------- #
# References
# --------------------------------------------------------------------------- #
def _reference_mixed(x, adj, w1, b1, w2, b2, w3, b3):
    """Same math and same bf16-input / f32-accumulate rounding as the kernels."""
    bf = lambda a: a.astype(jnp.bfloat16)
    ax = jnp.dot(bf(adj), bf(x), preferred_element_type=jnp.float32)
    h1 = jnp.maximum(jnp.dot(bf(ax), bf(w1), preferred_element_type=jnp.float32) + b1, 0.0)
    hw2 = jnp.dot(bf(h1), bf(w2), preferred_element_type=jnp.float32).astype(jnp.bfloat16)
    h2 = jnp.maximum(jnp.dot(bf(adj), hw2, preferred_element_type=jnp.float32) + b2, 0.0)
    return jnp.dot(bf(h2), bf(w3), preferred_element_type=jnp.float32) + b3


def _reference_f32(x, adj, w1, b1, w2, b2, w3, b3):
    """Exact module association / dtype (f32 GraphConvolution + Linear)."""
    h1 = jnp.maximum(adj @ (x @ w1) + b1, 0.0)
    h2 = jnp.maximum(adj @ (h1 @ w2) + b2, 0.0)
    return h2 @ w3 + b3


# --------------------------------------------------------------------------- #
# Demo / self-test
# --------------------------------------------------------------------------- #
if __name__ == "__main__":
    def run_case(key, n, nfeat, nhid):
        kx, kadj, kw1, kw2, kw3, kb1, kb2, kb3 = jax.random.split(key, 8)
        x = jax.random.normal(kx, (n, nfeat), jnp.float32)

        # Symmetric, row-normalized dense adjacency with self loops.
        a = jax.random.uniform(kadj, (n, n), jnp.float32)
        a = (a + a.T) * 0.5 + jnp.eye(n, dtype=jnp.float32)
        adj = a / jnp.sum(a, axis=1, keepdims=True)

        w1 = jax.random.normal(kw1, (nfeat, 2 * nhid), jnp.float32) * 0.1
        b1 = jax.random.normal(kb1, (2 * nhid,), jnp.float32) * 0.01
        w2 = jax.random.normal(kw2, (2 * nhid, nhid), jnp.float32) * 0.1
        b2 = jax.random.normal(kb2, (nhid,), jnp.float32) * 0.01
        w3 = jax.random.normal(kw3, (nhid, 1), jnp.float32) * 0.1
        b3 = jax.random.normal(kb3, (1,), jnp.float32) * 0.01

        out = gpn_valuator_forward(x, adj, w1, b1, w2, b2, w3, b3)
        out = jax.block_until_ready(out)
        assert out.shape == (n, 1)

        ref_mixed = _reference_mixed(x, adj, w1, b1, w2, b2, w3, b3)
        ref_f32 = _reference_f32(x, adj, w1, b1, w2, b2, w3, b3)
        assert jnp.allclose(out, ref_mixed, atol=2e-3, rtol=2e-3), (
            f"n={n}: max|diff| vs mixed ref = {jnp.max(jnp.abs(out - ref_mixed))}")
        assert jnp.allclose(out, ref_f32, atol=2e-2, rtol=2e-2), (
            f"n={n}: max|diff| vs f32 ref = {jnp.max(jnp.abs(out - ref_f32))}")

    key = jax.random.PRNGKey(0)
    key_a, key_b = jax.random.split(key)
    # Toy module shapes: single-tile grid (1, 1).
    run_case(key_a, n=16, nfeat=32, nhid=32)
    # Larger graph: multi-tile grid (3, 3) exercises the k-accumulation path.
    run_case(key_b, n=300, nfeat=32, nhid=32)

    print("KERNEL_OK")
</pallas_src>

<mosaic_0001>
module attributes {stable_mosaic.version = 11 : i64} {
  func.func @_gc1_kernel(%arg0: i32, %arg1: i32, %arg2: memref<128x128xbf16, #tpu.memory_space<vmem>>, %arg3: memref<128x32xbf16, #tpu.memory_space<vmem>>, %arg4: memref<32x64xbf16, #tpu.memory_space<vmem>>, %arg5: memref<1x64xf32, #tpu.memory_space<vmem>>, %arg6: memref<64x32xbf16, #tpu.memory_space<vmem>>, %arg7: memref<128x32xbf16, #tpu.memory_space<vmem>>, %arg8: memref<128x32xf32, #tpu.memory_space<vmem>>) attributes {dimension_semantics = [#tpu.dimension_semantics<parallel>, #tpu.dimension_semantics<arbitrary>], iteration_bounds = array<i64: 1, 1>, scalar_prefetch = 0 : i64, scratch_operands = 1 : i64, tpu.core_type = #tpu.core_type<tc>, window_params = [{transform_indices = @transform_0, window_bounds = array<i64: 128, 128>}, {pipeline_mode = #tpu.pipeline_mode<synchronous>, transform_indices = @transform_1, window_bounds = array<i64: 128, 32>}, {pipeline_mode = #tpu.pipeline_mode<synchronous>, transform_indices = @transform_2, window_bounds = array<i64: 32, 64>}, {pipeline_mode = #tpu.pipeline_mode<synchronous>, transform_indices = @transform_3, window_bounds = array<i64: 1, 64>}, {pipeline_mode = #tpu.pipeline_mode<synchronous>, transform_indices = @transform_4, window_bounds = array<i64: 64, 32>}, {transform_indices = @transform_5, window_bounds = array<i64: 128, 32>}]} {
    %c0_i32 = arith.constant 0 : i32
    %0 = arith.cmpi eq, %arg1, %c0_i32 : i32
    %1 = arith.extui %0 : i1 to i32
    %c0_i32_0 = arith.constant 0 : i32
    %2 = arith.cmpi ne, %1, %c0_i32_0 : i32
    scf.if %2 {
      %cst_9 = arith.constant 0.000000e+00 : f32
      %15 = vector.broadcast %cst_9 : f32 to vector<128x32xf32>
      %c0_10 = arith.constant 0 : index
      %c0_11 = arith.constant 0 : index
      %16 = vector.load %arg8[%c0_10, %c0_11] : memref<128x32xf32, #tpu.memory_space<vmem>>, vector<128x32xf32>
      tpu.vector_store %arg8[%c0_10, %c0_11], %15 {strides = array<i32>} : memref<128x32xf32, #tpu.memory_space<vmem>>, vector<128x32xf32>,
    } else {
    }
    %c128_i32 = arith.constant 128 : i32
    %3 = arith.muli %arg1, %c128_i32 : i32
    %4 = tpu.assume_multiple %3, 128 : i32
    %c0 = arith.constant 0 : index
    %c0_1 = arith.constant 0 : index
    %5 = vector.load %arg8[%c0, %c0_1] : memref<128x32xf32, #tpu.memory_space<vmem>>, vector<128x32xf32>
    %c0_2 = arith.constant 0 : index
    %c0_3 = arith.constant 0 : index
    %6 = vector.load %arg2[%c0_2, %c0_3] : memref<128x128xbf16, #tpu.memory_space<vmem>>, vector<128x128xbf16>
    %7 = arith.index_cast %4 : i32 to index
    %c0_4 = arith.constant 0 : index
    %8 = vector.load %arg3[%7, %c0_4] : memref<128x32xbf16, #tpu.memory_space<vmem>>, vector<128x32xbf16>
    %cst = arith.constant dense<0.000000e+00> : vector<128x32xf32>
    %9 = tpu.matmul %6, %8, %cst {dimension_numbers = #tpu.dot_dimension_numbers<[1], [0], [0], [1], [0, 0, 1, 1], [], []>} : vector<128x128xbf16>, vector<128x32xbf16>, vector<128x32xf32> -> vector<128x32xf32>
    %10 = arith.addf %5, %9 : vector<128x32xf32>
    %c0_5 = arith.constant 0 : index
    %c0_6 = arith.constant 0 : index
    %11 = vector.load %arg8[%c0_5, %c0_6] : memref<128x32xf32, #tpu.memory_space<vmem>>, vector<128x32xf32>
    tpu.vector_store %arg8[%c0_5, %c0_6], %10 {strides = array<i32>} : memref<128x32xf32, #tpu.memory_space<vmem>>, vector<128x32xf32>,
    %c0_i32_7 = arith.constant 0 : i32
    %12 = arith.cmpi eq, %arg1, %c0_i32_7 : i32
    %13 = arith.extui %12 : i1 to i32
    %c0_i32_8 = arith.constant 0 : i32
    %14 = arith.cmpi ne, %13, %c0_i32_8 : i32
    scf.if %14 {
      %c0_9 = arith.constant 0 : index
      %c0_10 = arith.constant 0 : index
      %15 = vector.load %arg8[%c0_9, %c0_10] : memref<128x32xf32, #tpu.memory_space<vmem>>, vector<128x32xf32>
      %16 = arith.truncf %15 : vector<128x32xf32> to vector<128x32xbf16>
      %c0_11 = arith.constant 0 : index
      %c0_12 = arith.constant 0 : index
      %17 = vector.load %arg4[%c0_11, %c0_12] : memref<32x64xbf16, #tpu.memory_space<vmem>>, vector<32x64xbf16>
      %cst_13 = arith.constant dense<0.000000e+00> : vector<128x64xf32>
      %18 = tpu.matmul %16, %17, %cst_13 {dimension_numbers = #tpu.dot_dimension_numbers<[1], [0], [0], [1], [0, 0, 1, 1], [], []>} : vector<128x32xbf16>, vector<32x64xbf16>, vector<128x64xf32> -> vector<128x64xf32>
      %c0_14 = arith.constant 0 : index
      %c0_15 = arith.constant 0 : index
      %19 = vector.load %arg5[%c0_14, %c0_15] : memref<1x64xf32, #tpu.memory_space<vmem>>, vector<1x64xf32>
      %20 = vector.broadcast %19 : vector<1x64xf32> to vector<128x64xf32>
      %21 = arith.addf %18, %20 : vector<128x64xf32>
      %cst_16 = arith.constant 0.000000e+00 : f32
      %22 = vector.broadcast %cst_16 : f32 to vector<128x64xf32>
      %23 = arith.maximumf %21, %22 : vector<128x64xf32>
      %24 = arith.truncf %23 : vector<128x64xf32> to vector<128x64xbf16>
      %c0_17 = arith.constant 0 : index
      %c0_18 = arith.constant 0 : index
      %25 = vector.load %arg6[%c0_17, %c0_18] : memref<64x32xbf16, #tpu.memory_space<vmem>>, vector<64x32xbf16>
      %cst_19 = arith.constant dense<0.000000e+00> : vector<128x32xf32>
      %26 = tpu.matmul %24, %25, %cst_19 {dimension_numbers = #tpu.dot_dimension_numbers<[1], [0], [0], [1], [0, 0, 1, 1], [], []>} : vector<128x64xbf16>, vector<64x32xbf16>, vector<128x32xf32> -> vector<128x32xf32>
      %27 = arith.truncf %26 : vector<128x32xf32> to vector<128x32xbf16>
      %c0_20 = arith.constant 0 : index
      %c0_21 = arith.constant 0 : index
      %28 = vector.load %arg7[%c0_20, %c0_21] : memref<128x32xbf16, #tpu.memory_space<vmem>>, vector<128x32xbf16>
      tpu.vector_store %arg7[%c0_20, %c0_21], %27 {strides = array<i32>} : memref<128x32xbf16, #tpu.memory_space<vmem>>, vector<128x32xbf16>,
    } else {
    }
    return
  }
  func.func @transform_0(%arg0: i32, %arg1: i32) -> (i32, i32) {
    %c0_i32 = arith.constant 0 : i32
    return %arg0, %arg1 : i32, i32
  }
  func.func @transform_1(%arg0: i32, %arg1: i32) -> (i32, i32) {
    %c0_i32 = arith.constant 0 : i32
    %c0_i32_0 = arith.constant 0 : i32
    %c0_i32_1 = arith.constant 0 : i32
    return %c0_i32, %c0_i32_0 : i32, i32
  }
  func.func @transform_2(%arg0: i32, %arg1: i32) -> (i32, i32) {
    %c0_i32 = arith.constant 0 : i32
    %c0_i32_0 = arith.constant 0 : i32
    %c0_i32_1 = arith.constant 0 : i32
    return %c0_i32, %c0_i32_0 : i32, i32
  }
  func.func @transform_3(%arg0: i32, %arg1: i32) -> (i32, i32) {
    %c0_i32 = arith.constant 0 : i32
    %c0_i32_0 = arith.constant 0 : i32
    %c0_i32_1 = arith.constant 0 : i32
    return %c0_i32, %c0_i32_0 : i32, i32
  }
  func.func @transform_4(%arg0: i32, %arg1: i32) -> (i32, i32) {
    %c0_i32 = arith.constant 0 : i32
    %c0_i32_0 = arith.constant 0 : i32
    %c0_i32_1 = arith.constant 0 : i32
    return %c0_i32, %c0_i32_0 : i32, i32
  }
  func.func @transform_5(%arg0: i32, %arg1: i32) -> (i32, i32) {
    %c0_i32 = arith.constant 0 : i32
    %c0_i32_0 = arith.constant 0 : i32
    return %arg0, %c0_i32 : i32, i32
  }
}

</mosaic_0001>

<llo_original>
// kernel: tpu_custom_call.1
$region0: #{tpu_custom_call.1}
  #allocation0 [shape = 'u32[]', space=smem, size = 0x4, offset = 0x4, fixed_abs, tag = 'smem constant byte address 0x4 - core index']
  #allocation1 [shape = 'u32[144,128]{1,0:T(1,128)}', space=vmem, size = 0x12000, scoped, tag = 'internal scratch']
  #allocation2 [shape = 'f32[128,32]{1,0:T(8,128)}', space=vmem, size = 0x10000, scoped, tag = 'scratch operand']
  %s0 = inlined_call_operand.vmem [shape: bf16[128,128], index: 0, kind: input, shape index: {}]
  %s1 = inlined_call_operand.vmem [shape: bf16[128,32], index: 1, kind: input, shape index: {}]
  %s2 = inlined_call_operand.vmem [shape: bf16[32,64], index: 2, kind: input, shape index: {}]
  %s3 = inlined_call_operand.vmem [shape: f32[1,64], index: 3, kind: input, shape index: {}]
  %s4 = inlined_call_operand.vmem [shape: bf16[64,32], index: 4, kind: input, shape index: {}]
  %s5 = inlined_call_operand.vmem [shape: bf16[128,32], index: 5, kind: output, shape index: {}]
  %s6 = sld [smem:[#allocation0]]
  $region38: #{tpu_custom_call.1} parent=0
    _
  %s8 = ssub.s32 1, %s6
  %s9 = scalar_select 0, %s8, %s6
  // Predicated region
  $region2: #{tpu_custom_call.1} parent=0 // pred_check
    _
  $region3: #{tpu_custom_call.1} parent=0 // pred_check_branch
    %11 = sbr.rel (0) target = $region5
  $region4: #{tpu_custom_call.1} parent=0 // pred_region
    _
  $region5: #{tpu_custom_call.1} parent=0 // pred_fallthru
    _
  // Predicated region
  $region6: #{tpu_custom_call.1} parent=0 // pred_check
    _
  $region7: #{tpu_custom_call.1} parent=0 // pred_check_branch
    %13 = sbr.rel (0) target = $region9
  $region8: #{tpu_custom_call.1} parent=0 // pred_region
    _
  $region9: #{tpu_custom_call.1} parent=0 // pred_fallthru
    _
  // Predicated region
  $region10: #{tpu_custom_call.1} parent=0 // pred_check
    _
  $region11: #{tpu_custom_call.1} parent=0 // pred_check_branch
    %15 = sbr.rel (0) target = $region13
  $region12: #{tpu_custom_call.1} parent=0 // pred_region
    _
  $region13: #{tpu_custom_call.1} parent=0 // pred_fallthru
    _
  // Predicated region
  $region14: #{tpu_custom_call.1} parent=0 // pred_check
    _
  $region15: #{tpu_custom_call.1} parent=0 // pred_check_branch
    %17 = sbr.rel (0) target = $region17
  $region16: #{tpu_custom_call.1} parent=0 // pred_region
    _
  $region17: #{tpu_custom_call.1} parent=0 // pred_fallthru
    _
  // Predicated region
  $region18: #{tpu_custom_call.1} parent=0 // pred_check
    _
  $region19: #{tpu_custom_call.1} parent=0 // pred_check_branch
    %19 = sbr.rel (0) target = $region21
  $region20: #{tpu_custom_call.1} parent=0 // pred_region
    _
  $region21: #{tpu_custom_call.1} parent=0 // pred_fallthru
    _
  %p21 = scmp.eq.s32.totalorder 0, 0
  // Predicated region
  $region22: #{tpu_custom_call.1} parent=0 // pred_check
    %p22 = pneg %p21
  $region23: #{tpu_custom_call.1} parent=0 // pred_check_branch
    %24 = sbr.rel (%p22) target = $region25
  $region24: #{tpu_custom_call.1} parent=0 // pred_region
    %vm25 = vcmask 261120
    %26 = vst.msk [vmem:[#allocation2] sm:$0xff] %vm25, 0.0
    %27 = vst.msk [vmem:[#allocation2 + $0x8] sm:$0xff] %vm25, 0.0
    %28 = vst.msk [vmem:[#allocation2 + $0x10] sm:$0xff] %vm25, 0.0
    %29 = vst.msk [vmem:[#allocation2 + $0x18] sm:$0xff] %vm25, 0.0
    %30 = vst.msk [vmem:[#allocation2 + $0x20] sm:$0xff] %vm25, 0.0
    %31 = vst.msk [vmem:[#allocation2 + $0x28] sm:$0xff] %vm25, 0.0
    %32 = vst.msk [vmem:[#allocation2 + $0x30] sm:$0xff] %vm25, 0.0
    %33 = vst.msk [vmem:[#allocation2 + $0x38] sm:$0xff] %vm25, 0.0
    %34 = vst.msk [vmem:[#allocation2 + $0x40] sm:$0xff] %vm25, 0.0
    %35 = vst.msk [vmem:[#allocation2 + $0x48] sm:$0xff] %vm25, 0.0
    %36 = vst.msk [vmem:[#allocation2 + $0x50] sm:$0xff] %vm25, 0.0
    %37 = vst.msk [vmem:[#allocation2 + $0x58] sm:$0xff] %vm25, 0.0
    %38 = vst.msk [vmem:[#allocation2 + $0x60] sm:$0xff] %vm25, 0.0
    %39 = vst.msk [vmem:[#allocation2 + $0x68] sm:$0xff] %vm25, 0.0
    %40 = vst.msk [vmem:[#allocation2 + $0x70] sm:$0xff] %vm25, 0.0
    %41 = vst.msk [vmem:[#allocation2 + $0x78] sm:$0xff] %vm25, 0.0
  $region25: #{tpu_custom_call.1} parent=0 // pred_fallthru
    _
  %s42 = smul.u32 0, 128
  %v43 = vld [vmem:[#allocation2] sm:$0xff]
  %v44 = vld [vmem:[#allocation2 + $0x8] sm:$0xff]
  %v45 = vld [vmem:[#allocation2 + $0x10] sm:$0xff]
  %v46 = vld [vmem:[#allocation2 + $0x18] sm:$0xff]
  %v47 = vld [vmem:[#allocation2 + $0x20] sm:$0xff]
  %v48 = vld [vmem:[#allocation2 + $0x28] sm:$0xff]
  %v49 = vld [vmem:[#allocation2 + $0x30] sm:$0xff]
  %v50 = vld [vmem:[#allocation2 + $0x38] sm:$0xff]
  %v51 = vld [vmem:[#allocation2 + $0x40] sm:$0xff]
  %v52 = vld [vmem:[#allocation2 + $0x48] sm:$0xff]
  %v53 = vld [vmem:[#allocation2 + $0x50] sm:$0xff]
  %v54 = vld [vmem:[#allocation2 + $0x58] sm:$0xff]
  %v55 = vld [vmem:[#allocation2 + $0x60] sm:$0xff]
  %v56 = vld [vmem:[#allocation2 + $0x68] sm:$0xff]
  %v57 = vld [vmem:[#allocation2 + $0x70] sm:$0xff]
  %v58 = vld [vmem:[#allocation2 + $0x78] sm:$0xff]
  %v59 = vld [vmem:[%s0] sm:$0xf]
  %v60 = vld [vmem:[%s0 + $0x4] sm:$0xf]
  %v61 = vld [vmem:[%s0 + $0x8] sm:$0xf]
  %v62 = vld [vmem:[%s0 + $0xc] sm:$0xf]
  %v63 = vld [vmem:[%s0 + $0x10] sm:$0xf]
  %v64 = vld [vmem:[%s0 + $0x14] sm:$0xf]
  %v65 = vld [vmem:[%s0 + $0x18] sm:$0xf]
  %v66 = vld [vmem:[%s0 + $0x1c] sm:$0xf]
  %v67 = vld [vmem:[%s0 + $0x20] sm:$0xf]
  %v68 = vld [vmem:[%s0 + $0x24] sm:$0xf]
  %v69 = vld [vmem:[%s0 + $0x28] sm:$0xf]
  %v70 = vld [vmem:[%s0 + $0x2c] sm:$0xf]
  %v71 = vld [vmem:[%s0 + $0x30] sm:$0xf]
  %v72 = vld [vmem:[%s0 + $0x34] sm:$0xf]
  %v73 = vld [vmem:[%s0 + $0x38] sm:$0xf]
  %v74 = vld [vmem:[%s0 + $0x3c] sm:$0xf]
  %s75 = sshra.s32 %s42, 3
  %s76 = sand.u32 %s42, 7
  %s77 = smul.addr %s75, 4
  %s78 = scalar_lea.vmem %s1, %s77
  %v79 = vld [vmem:[%s78] sm:$0xf]
  %v80 = vld [vmem:[%s78 + $0x4] sm:$0xf]
  %v81 = vld [vmem:[%s78 + $0x8] sm:$0xf]
  %v82 = vld [vmem:[%s78 + $0xc] sm:$0xf]
  %v83 = vld [vmem:[%s78 + $0x10] sm:$0xf]
  %v84 = vld [vmem:[%s78 + $0x14] sm:$0xf]
  %v85 = vld [vmem:[%s78 + $0x18] sm:$0xf]
  %v86 = vld [vmem:[%s78 + $0x1c] sm:$0xf]
  %v87 = vld [vmem:[%s78 + $0x20] sm:$0xf]
  %v88 = vld [vmem:[%s78 + $0x24] sm:$0xf]
  %v89 = vld [vmem:[%s78 + $0x28] sm:$0xf]
  %v90 = vld [vmem:[%s78 + $0x2c] sm:$0xf]
  %v91 = vld [vmem:[%s78 + $0x30] sm:$0xf]
  %v92 = vld [vmem:[%s78 + $0x34] sm:$0xf]
  %v93 = vld [vmem:[%s78 + $0x38] sm:$0xf]
  %v94 = vld [vmem:[%s78 + $0x3c] sm:$0xf]
  %v111 = vunpack.c.l.b16 %v59
  %v112 = vunpack.c.l.b16 %v60
  %v113 = vunpack.c.l.b16 %v61
  %v114 = vunpack.c.l.b16 %v62
  %v115 = vunpack.c.l.b16 %v63
  %v116 = vunpack.c.l.b16 %v64
  %v117 = vunpack.c.l.b16 %v65
  %v118 = vunpack.c.l.b16 %v66
  %v119 = vunpack.c.l.b16 %v67
  %v120 = vunpack.c.l.b16 %v68
  %v121 = vunpack.c.l.b16 %v69
  %v122 = vunpack.c.l.b16 %v70
  %v123 = vunpack.c.l.b16 %v71
  %v124 = vunpack.c.l.b16 %v72
  %v125 = vunpack.c.l.b16 %v73
  %v126 = vunpack.c.l.b16 %v74
  %v127 = vpack.c.b16 %v112, %v111
  %v128 = vpack.c.b16 %v114, %v113
  %v129 = vpack.c.b16 %v116, %v115
  %v130 = vpack.c.b16 %v118, %v117
  %v131 = vpack.c.b16 %v120, %v119
  %v132 = vpack.c.b16 %v122, %v121
  %v133 = vpack.c.b16 %v124, %v123
  %v134 = vpack.c.b16 %v126, %v125
  %v159 = vunpack.c.l.b16 %v79
  %v160 = vunpack.c.l.b16 %v80
  %v161 = vunpack.c.l.b16 %v81
  %v162 = vunpack.c.l.b16 %v82
  %v163 = vunpack.c.l.b16 %v83
  %v164 = vunpack.c.l.b16 %v84
  %v165 = vunpack.c.l.b16 %v85
  %v166 = vunpack.c.l.b16 %v86
  %v167 = vunpack.c.l.b16 %v87
  %v168 = vunpack.c.l.b16 %v88
  %v169 = vunpack.c.l.b16 %v89
  %v170 = vunpack.c.l.b16 %v90
  %v171 = vunpack.c.l.b16 %v91
  %v172 = vunpack.c.l.b16 %v92
  %v173 = vunpack.c.l.b16 %v93
  %v174 = vunpack.c.l.b16 %v94
  %v175 = vpack.c.b16 %v160, %v159
  %v176 = vpack.c.b16 %v162, %v161
  %v177 = vpack.c.b16 %v164, %v163
  %v178 = vpack.c.b16 %v166, %v165
  %v179 = vpack.c.b16 %v168, %v167
  %v180 = vpack.c.b16 %v170, %v169
  %v181 = vpack.c.b16 %v172, %v171
  %v182 = vpack.c.b16 %v174, %v173
  %191 = vmatprep.subr.bf16.mxu0 0
  %192 = vmatpush1.bf16.msra.mxu0 %v182
  %193 = vmatprep.subr.bf16.mxu0 0
  %194 = vmatpush1.bf16.msra.mxu0 %v181
  %195 = vmatprep.subr.bf16.mxu0 0
  %196 = vmatpush1.bf16.msra.mxu0 %v180
  %197 = vmatprep.subr.bf16.mxu0 0
  %198 = vmatpush1.bf16.msra.mxu0 %v179
  %199 = vmatprep.subr.bf16.mxu0 0
  %200 = vmatpush1.bf16.msra.mxu0 %v178
  %201 = vmatprep.subr.bf16.mxu0 0
  %202 = vmatpush1.bf16.msra.mxu0 %v177
  %203 = vmatprep.subr.bf16.mxu0 0
  %204 = vmatpush1.bf16.msra.mxu0 %v176
  %205 = vmatprep.subr.bf16.mxu0 0
  %206 = vmatpush1.bf16.msra.mxu0 %v175
  %207 = vmatprep.subr.bf16.mxu0 0
  %208 = vmatpush2.bf16.msra.mxu0 0
  %209 = vmatprep.subr.bf16.mxu0 0
  %210 = vmatpush2.bf16.msra.mxu0 0
  %211 = vmatprep.subr.bf16.mxu0 0
  %212 = vmatpush2.bf16.msra.mxu0 0
  %213 = vmatprep.subr.bf16.mxu0 0
  %214 = vmatpush2.bf16.msra.mxu0 0
  %215 = vmatprep.subr.bf16.mxu0 0
  %216 = vmatpush2.bf16.msra.mxu0 0
  %217 = vmatprep.subr.bf16.mxu0 0
  %218 = vmatpush2.bf16.msra.mxu0 0
  %219 = vmatprep.subr.bf16.mxu0 0
  %220 = vmatpush2.bf16.msra.mxu0 0
  %221 = vmatprep.subr.bf16.mxu0 0
  %222 = vmatpush2.bf16.msra.mxu0 0
  %223 = vmatprep.mubr.bf16.mxu0 0
  %224 = vmatmul.mubr.bf16.gmra.mxu0 %v127
  %v225 = vpop.f32.mrf.mxu0
  %v226 = vadd.f32 0.0, %v225
  %v227 = vpop.f32.mrf.mxu0
  %v228 = vpop.f32.mrf.mxu0
  %v229 = vadd.f32 0.0, %v228
  %v230 = vpop.f32.mrf.mxu0
  %231 = vmatprep.mubr.bf16.mxu0 0
  %232 = vmatmul.mubr.bf16.gmra.mxu0 %v128
  %v233 = vpop.f32.mrf.mxu0
  %v234 = vadd.f32 0.0, %v233
  %v235 = vpop.f32.mrf.mxu0
  %v236 = vpop.f32.mrf.mxu0
  %v237 = vadd.f32 0.0, %v236
  %v238 = vpop.f32.mrf.mxu0
  %239 = vmatprep.mubr.bf16.mxu0 0
  %240 = vmatmul.mubr.bf16.gmra.mxu0 %v129
  %v241 = vpop.f32.mrf.mxu0
  %v242 = vadd.f32 0.0, %v241
  %v243 = vpop.f32.mrf.mxu0
  %v244 = vpop.f32.mrf.mxu0
  %v245 = vadd.f32 0.0, %v244
  %v246 = vpop.f32.mrf.mxu0
  %247 = vmatprep.mubr.bf16.mxu0 0
  %248 = vmatmul.mubr.bf16.gmra.mxu0 %v130
  %v249 = vpop.f32.mrf.mxu0
  %v250 = vadd.f32 0.0, %v249
  %v251 = vpop.f32.mrf.mxu0
  %v252 = vpop.f32.mrf.mxu0
  %v253 = vadd.f32 0.0, %v252
  %v254 = vpop.f32.mrf.mxu0
  %255 = vmatprep.mubr.bf16.mxu0 0
  %256 = vmatmul.mubr.bf16.gmra.mxu0 %v131
  %v257 = vpop.f32.mrf.mxu0
  %v258 = vadd.f32 0.0, %v257
  %v259 = vpop.f32.mrf.mxu0
  %v260 = vpop.f32.mrf.mxu0
  %v261 = vadd.f32 0.0, %v260
  %v262 = vpop.f32.mrf.mxu0
  %263 = vmatprep.mubr.bf16.mxu0 0
  %264 = vmatmul.mubr.bf16.gmra.mxu0 %v132
  %v265 = vpop.f32.mrf.mxu0
  %v266 = vadd.f32 0.0, %v265
  %v267 = vpop.f32.mrf.mxu0
  %v268 = vpop.f32.mrf.mxu0
  %v269 = vadd.f32 0.0, %v268
  %v270 = vpop.f32.mrf.mxu0
  %271 = vmatprep.mubr.bf16.mxu0 0
  %272 = vmatmul.mubr.bf16.gmra.mxu0 %v133
  %v273 = vpop.f32.mrf.mxu0
  %v274 = vadd.f32 0.0, %v273
  %v275 = vpop.f32.mrf.mxu0
  %v276 = vpop.f32.mrf.mxu0
  %v277 = vadd.f32 0.0, %v276
  %v278 = vpop.f32.mrf.mxu0
  %279 = vmatprep.mubr.bf16.mxu0 0
  %280 = vmatmul.mubr.bf16.gmra.mxu0 %v134
  %v281 = vpop.f32.mrf.mxu0
  %v282 = vadd.f32 0.0, %v281
  %v283 = vpop.f32.mrf.mxu0
  %v284 = vpop.f32.mrf.mxu0
  %v285 = vadd.f32 0.0, %v284
  %v286 = vpop.f32.mrf.mxu0
  %287 = vdwg.mxu0
  %v288 = vadd.f32 %v43, %v226
  %v289 = vadd.f32 %v44, %v229
  %v290 = vadd.f32 %v45, %v234
  %v291 = vadd.f32 %v46, %v237
  %v292 = vadd.f32 %v47, %v242
  %v293 = vadd.f32 %v48, %v245
  %v294 = vadd.f32 %v49, %v250
  %v295 = vadd.f32 %v50, %v253
  %v296 = vadd.f32 %v51, %v258
  %v297 = vadd.f32 %v52, %v261
  %v298 = vadd.f32 %v53, %v266
  %v299 = vadd.f32 %v54, %v269
  %v300 = vadd.f32 %v55, %v274
  %v301 = vadd.f32 %v56, %v277
  %v302 = vadd.f32 %v57, %v282
  %v303 = vadd.f32 %v58, %v285
  %vm304 = vcmask 261120
  %305 = vst.msk [vmem:[#allocation2] sm:$0xff] %vm304, %v288
  %306 = vst.msk [vmem:[#allocation2 + $0x8] sm:$0xff] %vm304, %v289
  %307 = vst.msk [vmem:[#allocation2 + $0x10] sm:$0xff] %vm304, %v290
  %308 = vst.msk [vmem:[#allocation2 + $0x18] sm:$0xff] %vm304, %v291
  %309 = vst.msk [vmem:[#allocation2 + $0x20] sm:$0xff] %vm304, %v292
  %310 = vst.msk [vmem:[#allocation2 + $0x28] sm:$0xff] %vm304, %v293
  %311 = vst.msk [vmem:[#allocation2 + $0x30] sm:$0xff] %vm304, %v294
  %312 = vst.msk [vmem:[#allocation2 + $0x38] sm:$0xff] %vm304, %v295
  %313 = vst.msk [vmem:[#allocation2 + $0x40] sm:$0xff] %vm304, %v296
  %314 = vst.msk [vmem:[#allocation2 + $0x48] sm:$0xff] %vm304, %v297
  %315 = vst.msk [vmem:[#allocation2 + $0x50] sm:$0xff] %vm304, %v298
  %316 = vst.msk [vmem:[#allocation2 + $0x58] sm:$0xff] %vm304, %v299
  %317 = vst.msk [vmem:[#allocation2 + $0x60] sm:$0xff] %vm304, %v300
  %318 = vst.msk [vmem:[#allocation2 + $0x68] sm:$0xff] %vm304, %v301
  %319 = vst.msk [vmem:[#allocation2 + $0x70] sm:$0xff] %vm304, %v302
  %320 = vst.msk [vmem:[#allocation2 + $0x78] sm:$0xff] %vm304, %v303
  // Predicated region
  $region26: #{tpu_custom_call.1} parent=0 // pred_check
    %p321 = pneg %p21
  $region27: #{tpu_custom_call.1} parent=0 // pred_check_branch
    %323 = sbr.rel (%p321) target = $region29
  $region28: #{tpu_custom_call.1} parent=0 // pred_region
    %v324 = vld [vmem:[#allocation2] sm:$0xff]
    %v325 = vld [vmem:[#allocation2 + $0x8] sm:$0xff]
    %v326 = vld [vmem:[#allocation2 + $0x10] sm:$0xff]
    %v327 = vld [vmem:[#allocation2 + $0x18] sm:$0xff]
    %v328 = vld [vmem:[#allocation2 + $0x20] sm:$0xff]
    %v329 = vld [vmem:[#allocation2 + $0x28] sm:$0xff]
    %v330 = vld [vmem:[#allocation2 + $0x30] sm:$0xff]
    %v331 = vld [vmem:[#allocation2 + $0x38] sm:$0xff]
    %v332 = vld [vmem:[#allocation2 + $0x40] sm:$0xff]
    %v333 = vld [vmem:[#allocation2 + $0x48] sm:$0xff]
    %v334 = vld [vmem:[#allocation2 + $0x50] sm:$0xff]
    %v335 = vld [vmem:[#allocation2 + $0x58] sm:$0xff]
    %v336 = vld [vmem:[#allocation2 + $0x60] sm:$0xff]
    %v337 = vld [vmem:[#allocation2 + $0x68] sm:$0xff]
    %v338 = vld [vmem:[#allocation2 + $0x70] sm:$0xff]
    %v339 = vld [vmem:[#allocation2 + $0x78] sm:$0xff]
    %v340 = vpack.c.bf16 %v325, %v324
    %v341 = vpack.c.bf16 %v327, %v326
    %v342 = vpack.c.bf16 %v329, %v328
    %v343 = vpack.c.bf16 %v331, %v330
    %v344 = vpack.c.bf16 %v333, %v332
    %v345 = vpack.c.bf16 %v335, %v334
    %v346 = vpack.c.bf16 %v337, %v336
    %v347 = vpack.c.bf16 %v339, %v338
    %v348 = vld [vmem:[%s2] sm:$0xf]
    %v349 = vld [vmem:[%s2 + $0x4] sm:$0xf]
    %v350 = vld [vmem:[%s2 + $0x8] sm:$0xf]
    %v351 = vld [vmem:[%s2 + $0xc] sm:$0xf]
    %v352 = vld [vmem:[%s3] sm:$0x1]
    %v354 = vlaneseq
    %v355 = vshrl.u32 %v354, 7
    %v356 = vsub.s32 0, %v355
    %v357 = vrot.slane %v352, %v356
    %v363 = vunpack.c.l.b16 %v348
    %v364 = vunpack.c.l.b16 %v349
    %v365 = vunpack.c.l.b16 %v350
    %v366 = vunpack.c.l.b16 %v351
    %v367 = vpack.c.b16 %v364, %v363
    %v368 = vpack.c.b16 %v366, %v365
    %v372 = vsel %vm304, %v340, 0
    %v375 = vsel %vm304, %v341, 0
    %v378 = vsel %vm304, %v342, 0
    %v381 = vsel %vm304, %v343, 0
    %v384 = vsel %vm304, %v344, 0
    %v387 = vsel %vm304, %v345, 0
    %v390 = vsel %vm304, %v346, 0
    %v393 = vsel %vm304, %v347, 0
    %395 = vmatprep.subr.bf16.mxu0 0
    %396 = vmatpush1.bf16.msra.mxu0 0
    %397 = vmatprep.subr.bf16.mxu0 0
    %398 = vmatpush1.bf16.msra.mxu0 0
    %399 = vmatprep.subr.bf16.mxu0 0
    %400 = vmatpush1.bf16.msra.mxu0 0
    %401 = vmatprep.subr.bf16.mxu0 0
    %402 = vmatpush1.bf16.msra.mxu0 0
    %403 = vmatprep.subr.bf16.mxu0 0
    %404 = vmatpush1.bf16.msra.mxu0 0
    %405 = vmatprep.subr.bf16.mxu0 0
    %406 = vmatpush1.bf16.msra.mxu0 0
    %407 = vmatprep.subr.bf16.mxu0 0
    %408 = vmatpush1.bf16.msra.mxu0 %v368
    %409 = vmatprep.subr.bf16.mxu0 0
    %410 = vmatpush1.bf16.msra.mxu0 %v367
    %411 = vmatprep.subr.bf16.mxu0 0
    %412 = vmatpush2.bf16.msra.mxu0 0
    %413 = vmatprep.subr.bf16.mxu0 0
    %414 = vmatpush2.bf16.msra.mxu0 0
    %415 = vmatprep.subr.bf16.mxu0 0
    %416 = vmatpush2.bf16.msra.mxu0 0
    %417 = vmatprep.subr.bf16.mxu0 0
    %418 = vmatpush2.bf16.msra.mxu0 0
    %419 = vmatprep.subr.bf16.mxu0 0
    %420 = vmatpush2.bf16.msra.mxu0 0
    %421 = vmatprep.subr.bf16.mxu0 0
    %422 = vmatpush2.bf16.msra.mxu0 0
    %423 = vmatprep.subr.bf16.mxu0 0
    %424 = vmatpush2.bf16.msra.mxu0 0
    %425 = vmatprep.subr.bf16.mxu0 0
    %426 = vmatpush2.bf16.msra.mxu0 0
    %427 = vmatprep.mubr.bf16.mxu0 0
    %428 = vmatmul.mubr.bf16.gmra.mxu0 %v372
    %v429 = vpop.f32.mrf.mxu0
    %v430 = vadd.f32 %v357, %v429
    %v431 = vpop.f32.mrf.mxu0
    %v432 = vpop.f32.mrf.mxu0
    %v433 = vadd.f32 %v357, %v432
    %v434 = vpop.f32.mrf.mxu0
    %435 = vmatprep.mubr.bf16.mxu0 0
    %436 = vmatmul.mubr.bf16.gmra.mxu0 %v375
    %v437 = vpop.f32.mrf.mxu0
    %v438 = vadd.f32 %v357, %v437
    %v439 = vpop.f32.mrf.mxu0
    %v440 = vpop.f32.mrf.mxu0
    %v441 = vadd.f32 %v357, %v440
    %v442 = vpop.f32.mrf.mxu0
    %443 = vmatprep.mubr.bf16.mxu0 0
    %444 = vmatmul.mubr.bf16.gmra.mxu0 %v378
    %v445 = vpop.f32.mrf.mxu0
    %v446 = vadd.f32 %v357, %v445
    %v447 = vpop.f32.mrf.mxu0
    %v448 = vpop.f32.mrf.mxu0
    %v449 = vadd.f32 %v357, %v448
    %v450 = vpop.f32.mrf.mxu0
    %451 = vmatprep.mubr.bf16.mxu0 0
    %452 = vmatmul.mubr.bf16.gmra.mxu0 %v381
    %v453 = vpop.f32.mrf.mxu0
    %v454 = vadd.f32 %v357, %v453
    %v455 = vpop.f32.mrf.mxu0
    %v456 = vpop.f32.mrf.mxu0
    %v457 = vadd.f32 %v357, %v456
    %v458 = vpop.f32.mrf.mxu0
    %459 = vmatprep.mubr.bf16.mxu0 0
    %460 = vmatmul.mubr.bf16.gmra.mxu0 %v384
    %v461 = vpop.f32.mrf.mxu0
    %v462 = vadd.f32 %v357, %v461
    %v463 = vpop.f32.mrf.mxu0
    %v464 = vpop.f32.mrf.mxu0
    %v465 = vadd.f32 %v357, %v464
    %v466 = vpop.f32.mrf.mxu0
    %467 = vmatprep.mubr.bf16.mxu0 0
    %468 = vmatmul.mubr.bf16.gmra.mxu0 %v387
    %v469 = vpop.f32.mrf.mxu0
    %v470 = vadd.f32 %v357, %v469
    %v471 = vpop.f32.mrf.mxu0
    %v472 = vpop.f32.mrf.mxu0
    %v473 = vadd.f32 %v357, %v472
    %v474 = vpop.f32.mrf.mxu0
    %475 = vmatprep.mubr.bf16.mxu0 0
    %476 = vmatmul.mubr.bf16.gmra.mxu0 %v390
    %v477 = vpop.f32.mrf.mxu0
    %v478 = vadd.f32 %v357, %v477
    %v479 = vpop.f32.mrf.mxu0
    %v480 = vpop.f32.mrf.mxu0
    %v481 = vadd.f32 %v357, %v480
    %v482 = vpop.f32.mrf.mxu0
    %483 = vmatprep.mubr.bf16.mxu0 0
    %484 = vmatmul.mubr.bf16.gmra.mxu0 %v393
    %v485 = vpop.f32.mrf.mxu0
    %v486 = vadd.f32 %v357, %v485
    %v487 = vpop.f32.mrf.mxu0
    %v488 = vpop.f32.mrf.mxu0
    %v489 = vadd.f32 %v357, %v488
    %v490 = vpop.f32.mrf.mxu0
    %491 = vdwg.mxu0
    %v492 = vmax.f32 %v430, 0.0
    %v493 = vmax.f32 %v433, 0.0
    %v494 = vmax.f32 %v438, 0.0
    %v495 = vmax.f32 %v441, 0.0
    %v496 = vmax.f32 %v446, 0.0
    %v497 = vmax.f32 %v449, 0.0
    %v498 = vmax.f32 %v454, 0.0
    %v499 = vmax.f32 %v457, 0.0
    %v500 = vmax.f32 %v462, 0.0
    %v501 = vmax.f32 %v465, 0.0
    %v502 = vmax.f32 %v470, 0.0
    %v503 = vmax.f32 %v473, 0.0
    %v504 = vmax.f32 %v478, 0.0
    %v505 = vmax.f32 %v481, 0.0
    %v506 = vmax.f32 %v486, 0.0
    %v507 = vmax.f32 %v489, 0.0
    %v508 = vpack.c.bf16 %v493, %v492
    %v509 = vpack.c.bf16 %v495, %v494
    %v510 = vpack.c.bf16 %v497, %v496
    %v511 = vpack.c.bf16 %v499, %v498
    %v512 = vpack.c.bf16 %v501, %v500
    %v513 = vpack.c.bf16 %v503, %v502
    %v514 = vpack.c.bf16 %v505, %v504
    %v515 = vpack.c.bf16 %v507, %v506
    %v516 = vld [vmem:[%s4] sm:$0xf]
    %v517 = vld [vmem:[%s4 + $0x4] sm:$0xf]
    %v518 = vld [vmem:[%s4 + $0x8] sm:$0xf]
    %v519 = vld [vmem:[%s4 + $0xc] sm:$0xf]
    %v520 = vld [vmem:[%s4 + $0x10] sm:$0xf]
    %v521 = vld [vmem:[%s4 + $0x14] sm:$0xf]
    %v522 = vld [vmem:[%s4 + $0x18] sm:$0xf]
    %v523 = vld [vmem:[%s4 + $0x1c] sm:$0xf]
    %v532 = vunpack.c.l.b16 %v516
    %v533 = vunpack.c.l.b16 %v517
    %v534 = vunpack.c.l.b16 %v518
    %v535 = vunpack.c.l.b16 %v519
    %v536 = vunpack.c.l.b16 %v520
    %v537 = vunpack.c.l.b16 %v521
    %v538 = vunpack.c.l.b16 %v522
    %v539 = vunpack.c.l.b16 %v523
    %v540 = vpack.c.b16 %v533, %v532
    %v541 = vpack.c.b16 %v535, %v534
    %v542 = vpack.c.b16 %v537, %v536
    %v543 = vpack.c.b16 %v539, %v538
    %vm548 = vcmask 523264
    %v550 = vsel %vm548, %v508, 0
    %v553 = vsel %vm548, %v509, 0
    %v556 = vsel %vm548, %v510, 0
    %v559 = vsel %vm548, %v511, 0
    %v562 = vsel %vm548, %v512, 0
    %v565 = vsel %vm548, %v513, 0
    %v568 = vsel %vm548, %v514, 0
    %v571 = vsel %vm548, %v515, 0
    %573 = vmatprep.subr.bf16.mxu0 0
    %574 = vmatpush1.bf16.msra.mxu0 0
    %575 = vmatprep.subr.bf16.mxu0 0
    %576 = vmatpush1.bf16.msra.mxu0 0
    %577 = vmatprep.subr.bf16.mxu0 0
    %578 = vmatpush1.bf16.msra.mxu0 0
    %579 = vmatprep.subr.bf16.mxu0 0
    %580 = vmatpush1.bf16.msra.mxu0 0
    %581 = vmatprep.subr.bf16.mxu0 0
    %582 = vmatpush1.bf16.msra.mxu0 %v543
    %583 = vmatprep.subr.bf16.mxu0 0
    %584 = vmatpush1.bf16.msra.mxu0 %v542
    %585 = vmatprep.subr.bf16.mxu0 0
    %586 = vmatpush1.bf16.msra.mxu0 %v541
    %587 = vmatprep.subr.bf16.mxu0 0
    %588 = vmatpush1.bf16.msra.mxu0 %v540
    %589 = vmatprep.subr.bf16.mxu0 0
    %590 = vmatpush2.bf16.msra.mxu0 0
    %591 = vmatprep.subr.bf16.mxu0 0
    %592 = vmatpush2.bf16.msra.mxu0 0
    %593 = vmatprep.subr.bf16.mxu0 0
    %594 = vmatpush2.bf16.msra.mxu0 0
    %595 = vmatprep.subr.bf16.mxu0 0
    %596 = vmatpush2.bf16.msra.mxu0 0
    %597 = vmatprep.subr.bf16.mxu0 0
    %598 = vmatpush2.bf16.msra.mxu0 0
    %599 = vmatprep.subr.bf16.mxu0 0
    %600 = vmatpush2.bf16.msra.mxu0 0
    %601 = vmatprep.subr.bf16.mxu0 0
    %602 = vmatpush2.bf16.msra.mxu0 0
    %603 = vmatprep.subr.bf16.mxu0 0
    %604 = vmatpush2.bf16.msra.mxu0 0
    %605 = vmatprep.mubr.bf16.mxu0 0
    %606 = vmatmul.mubr.bf16.gmra.mxu0 %v550
    %v607 = vpop.f32.mrf.mxu0
    %v608 = vadd.f32 0.0, %v607
    %v609 = vpop.f32.mrf.mxu0
    %v610 = vpop.f32.mrf.mxu0
    %v611 = vadd.f32 0.0, %v610
    %v612 = vpop.f32.mrf.mxu0
    %613 = vmatprep.mubr.bf16.mxu0 0
    %614 = vmatmul.mubr.bf16.gmra.mxu0 %v553
    %v615 = vpop.f32.mrf.mxu0
    %v616 = vadd.f32 0.0, %v615
    %v617 = vpop.f32.mrf.mxu0
    %v618 = vpop.f32.mrf.mxu0
    %v619 = vadd.f32 0.0, %v618
    %v620 = vpop.f32.mrf.mxu0
    %621 = vmatprep.mubr.bf16.mxu0 0
    %622 = vmatmul.mubr.bf16.gmra.mxu0 %v556
    %v623 = vpop.f32.mrf.mxu0
    %v624 = vadd.f32 0.0, %v623
    %v625 = vpop.f32.mrf.mxu0
    %v626 = vpop.f32.mrf.mxu0
    %v627 = vadd.f32 0.0, %v626
    %v628 = vpop.f32.mrf.mxu0
    %629 = vmatprep.mubr.bf16.mxu0 0
    %630 = vmatmul.mubr.bf16.gmra.mxu0 %v559
    %v631 = vpop.f32.mrf.mxu0
    %v632 = vadd.f32 0.0, %v631
    %v633 = vpop.f32.mrf.mxu0
    %v634 = vpop.f32.mrf.mxu0
    %v635 = vadd.f32 0.0, %v634
    %v636 = vpop.f32.mrf.mxu0
    %637 = vmatprep.mubr.bf16.mxu0 0
    %638 = vmatmul.mubr.bf16.gmra.mxu0 %v562
    %v639 = vpop.f32.mrf.mxu0
    %v640 = vadd.f32 0.0, %v639
    %v641 = vpop.f32.mrf.mxu0
    %v642 = vpop.f32.mrf.mxu0
    %v643 = vadd.f32 0.0, %v642
    %v644 = vpop.f32.mrf.mxu0
    %645 = vmatprep.mubr.bf16.mxu0 0
    %646 = vmatmul.mubr.bf16.gmra.mxu0 %v565
    %v647 = vpop.f32.mrf.mxu0
    %v648 = vadd.f32 0.0, %v647
    %v649 = vpop.f32.mrf.mxu0
    %v650 = vpop.f32.mrf.mxu0
    %v651 = vadd.f32 0.0, %v650
    %v652 = vpop.f32.mrf.mxu0
    %653 = vmatprep.mubr.bf16.mxu0 0
    %654 = vmatmul.mubr.bf16.gmra.mxu0 %v568
    %v655 = vpop.f32.mrf.mxu0
    %v656 = vadd.f32 0.0, %v655
    %v657 = vpop.f32.mrf.mxu0
    %v658 = vpop.f32.mrf.mxu0
    %v659 = vadd.f32 0.0, %v658
    %v660 = vpop.f32.mrf.mxu0
    %661 = vmatprep.mubr.bf16.mxu0 0
    %662 = vmatmul.mubr.bf16.gmra.mxu0 %v571
    %v663 = vpop.f32.mrf.mxu0
    %v664 = vadd.f32 0.0, %v663
    %v665 = vpop.f32.mrf.mxu0
    %v666 = vpop.f32.mrf.mxu0
    %v667 = vadd.f32 0.0, %v666
    %v668 = vpop.f32.mrf.mxu0
    %669 = vdwg.mxu0
    %v670 = vpack.c.bf16 %v611, %v608
    %v671 = vpack.c.bf16 %v619, %v616
    %v672 = vpack.c.bf16 %v627, %v624
    %v673 = vpack.c.bf16 %v635, %v632
    %v674 = vpack.c.bf16 %v643, %v640
    %v675 = vpack.c.bf16 %v651, %v648
    %v676 = vpack.c.bf16 %v659, %v656
    %v677 = vpack.c.bf16 %v667, %v664
    %v686 = vunpack.c.l.b16 %v670
    %v687 = vunpack.c.h.b16 %v670
    %v688 = vunpack.c.l.b16 %v671
    %v689 = vunpack.c.h.b16 %v671
    %v690 = vunpack.c.l.b16 %v672
    %v691 = vunpack.c.h.b16 %v672
    %v692 = vunpack.c.l.b16 %v673
    %v693 = vunpack.c.h.b16 %v673
    %v694 = vunpack.c.l.b16 %v674
    %v695 = vunpack.c.h.b16 %v674
    %v696 = vunpack.c.l.b16 %v675
    %v697 = vunpack.c.h.b16 %v675
    %v698 = vunpack.c.l.b16 %v676
    %v699 = vunpack.c.h.b16 %v676
    %v700 = vunpack.c.l.b16 %v677
    %v701 = vunpack.c.h.b16 %v677
    %v702 = vpack.c.b16 %v686, %v686
    %v703 = vpack.c.b16 %v687, %v687
    %v704 = vpack.c.b16 %v688, %v688
    %v705 = vpack.c.b16 %v689, %v689
    %v706 = vpack.c.b16 %v690, %v690
    %v707 = vpack.c.b16 %v691, %v691
    %v708 = vpack.c.b16 %v692, %v692
    %v709 = vpack.c.b16 %v693, %v693
    %v710 = vpack.c.b16 %v694, %v694
    %v711 = vpack.c.b16 %v695, %v695
    %v712 = vpack.c.b16 %v696, %v696
    %v713 = vpack.c.b16 %v697, %v697
    %v714 = vpack.c.b16 %v698, %v698
    %v715 = vpack.c.b16 %v699, %v699
    %v716 = vpack.c.b16 %v700, %v700
    %v717 = vpack.c.b16 %v701, %v701
    %vm734 = vcmask 257024
    %735 = vst.msk [vmem:[%s5] sm:$0xf] %vm734, %v702
    %736 = vst.msk [vmem:[%s5 + $0x4] sm:$0xf] %vm734, %v703
    %737 = vst.msk [vmem:[%s5 + $0x8] sm:$0xf] %vm734, %v704
    %738 = vst.msk [vmem:[%s5 + $0xc] sm:$0xf] %vm734, %v705
    %739 = vst.msk [vmem:[%s5 + $0x10] sm:$0xf] %vm734, %v706
    %740 = vst.msk [vmem:[%s5 + $0x14] sm:$0xf] %vm734, %v707
    %741 = vst.msk [vmem:[%s5 + $0x18] sm:$0xf] %vm734, %v708
    %742 = vst.msk [vmem:[%s5 + $0x1c] sm:$0xf] %vm734, %v709
    %743 = vst.msk [vmem:[%s5 + $0x20] sm:$0xf] %vm734, %v710
    %744 = vst.msk [vmem:[%s5 + $0x24] sm:$0xf] %vm734, %v711
    %745 = vst.msk [vmem:[%s5 + $0x28] sm:$0xf] %vm734, %v712
    %746 = vst.msk [vmem:[%s5 + $0x2c] sm:$0xf] %vm734, %v713
    %747 = vst.msk [vmem:[%s5 + $0x30] sm:$0xf] %vm734, %v714
    %748 = vst.msk [vmem:[%s5 + $0x34] sm:$0xf] %vm734, %v715
    %749 = vst.msk [vmem:[%s5 + $0x38] sm:$0xf] %vm734, %v716
    %750 = vst.msk [vmem:[%s5 + $0x3c] sm:$0xf] %vm734, %v717
  $region29: #{tpu_custom_call.1} parent=0 // pred_fallthru
    _
  // Predicated region
  $region30: #{tpu_custom_call.1} parent=0 // pred_check
    _
  $region31: #{tpu_custom_call.1} parent=0 // pred_check_branch
    %752 = sbr.rel (0) target = $region33
  $region32: #{tpu_custom_call.1} parent=0 // pred_region
    _
  $region33: #{tpu_custom_call.1} parent=0 // pred_fallthru
    _
  // Predicated region
  $region34: #{tpu_custom_call.1} parent=0 // pred_check
    _
  $region35: #{tpu_custom_call.1} parent=0 // pred_check_branch
    %754 = sbr.rel (0) target = $region37
  $region36: #{tpu_custom_call.1} parent=0 // pred_region
    _
  $region37: #{tpu_custom_call.1} parent=0 // pred_fallthru
    _

</llo_original>
